<compile_context>
chip_gen: v5e
topology: v5e:2x2
jax: 0.10.0
libtpu: 0.0.40
codegen_flags: <defaults>
</compile_context>

<pallas_src>
import random

import numpy as np
import jax
import jax.numpy as jnp
from jax.experimental import pallas as pl
from jax.experimental.pallas import tpu as pltpu

# target tile sizes (clamped to the padded dims for small problems)
_TM, _TN, _TK = 256, 256, 512


def _round_up(x, m):
    return ((x + m - 1) // m) * m


def _pad_and_tile(dim, base, tile):
    """Round `dim` up to `base`, clamp the tile, re-round so tile divides the pad."""
    p = _round_up(dim, base)
    t = min(tile, p)
    return _round_up(p, t), t


# ----------------------------- Pallas kernel --------------------------------
def gcn_agg_kernel(mask_ref, emb_ref, inv_col_ref, inv_row_ref, out_ref, acc_ref):
    """mask (tm,tk) bf16, emb (tk,tn) f32, inv_col (tk,1) f32, inv_row (tm,1) f32."""
    k = pl.program_id(2)

    @pl.when(k == 0)
    def _init():
        acc_ref[...] = jnp.zeros_like(acc_ref)

    # Column normalization folded onto the emb K-tile rows (U*D work, not B*U).
    emb_scaled = emb_ref[...] * inv_col_ref[...]                 # (tk, tn)
    acc_ref[...] += jnp.dot(
        mask_ref[...].astype(jnp.float32), emb_scaled,
        preferred_element_type=jnp.float32)

    @pl.when(k == pl.num_programs(2) - 1)
    def _finalize():
        # Row normalization applied once to the output tile (B*D work).
        out_ref[...] = (acc_ref[...] * inv_row_ref[...]).astype(out_ref.dtype)


def gcn_aggregate(mask, emb, inv_col, inv_row, tm, tn, tk):
    """mask (Bp,Up) bf16, emb (Up,Dp) f32, inv_col (Up,1), inv_row (Bp,1) -> (Bp,Dp)."""
    Bp, Up = mask.shape
    Up2, Dp = emb.shape
    assert Up == Up2 and Bp % tm == 0 and Up % tk == 0 and Dp % tn == 0

    return pl.pallas_call(
        gcn_agg_kernel,
        out_shape=jax.ShapeDtypeStruct((Bp, Dp), jnp.float32),
        grid_spec=pltpu.PrefetchScalarGridSpec(
            num_scalar_prefetch=0,
            grid=(Bp // tm, Dp // tn, Up // tk),
            in_specs=[
                pl.BlockSpec((tm, tk), lambda i, j, k: (i, k)),   # mask
                pl.BlockSpec((tk, tn), lambda i, j, k: (k, j)),   # emb
                pl.BlockSpec((tk, 1), lambda i, j, k: (k, 0)),    # inv_col
                pl.BlockSpec((tm, 1), lambda i, j, k: (i, 0)),    # inv_row
            ],
            out_specs=pl.BlockSpec((tm, tn), lambda i, j, k: (i, j)),
            scratch_shapes=[pltpu.VMEM((tm, tn), jnp.float32)],
        ),
        compiler_params=pltpu.CompilerParams(
            dimension_semantics=("parallel", "parallel", "arbitrary")),
    )(mask, emb, inv_col, inv_row)


# ------------------------------ host-side glue -------------------------------
def build_host_inputs(nodes, to_neighs):
    """Mirror the torch python mask construction; return padded device-ready arrays."""
    samp_neighs = [set(n) | {int(nodes[i])} for i, n in enumerate(to_neighs)]
    unique_nodes_list = list(set.union(*samp_neighs))
    unique_nodes = {n: i for i, n in enumerate(unique_nodes_list)}

    B, U = len(samp_neighs), len(unique_nodes_list)
    Bp, tm = _pad_and_tile(B, 16, _TM)     # 16-row base: safe for bf16 sublane packing
    Up, tk = _pad_and_tile(U, 128, _TK)

    # Binary mask built directly at padded shape (no device-side zeros+scatter),
    # shipped as bf16 (exact for {0,1}, halves the dominant HBM/DMA stream).
    mask = np.zeros((Bp, Up), dtype=np.float32)
    column_indices = [unique_nodes[n] for s in samp_neighs for n in s]
    row_indices = [i for i, s in enumerate(samp_neighs) for _ in s]
    mask[row_indices, column_indices] = 1.0
    mask_bf16 = mask.astype(jnp.bfloat16)

    # Exact row/col degree counts straight from the neighbor lists -> inverse sqrt
    # norms (host-side; avoids any partial-sum hazard once the kernel tiles over U).
    inv_row = np.zeros((Bp, 1), np.float32)
    inv_row[:B, 0] = 1.0 / np.sqrt([len(s) for s in samp_neighs])
    col_counts = np.bincount(column_indices, minlength=U).astype(np.float32)
    inv_col = np.zeros((Up, 1), np.float32)
    inv_col[:U, 0] = 1.0 / np.sqrt(col_counts)

    # Unique-node gather indices padded to Up (padded rows are zeroed by inv_col == 0).
    idx = np.zeros((Up,), np.int32)
    idx[:U] = unique_nodes_list

    return mask_bf16, inv_row, inv_col, idx, (B, U, tm, tk)


class GCNAggregatorPallas:
    """gcn=False, gat=False path of the PyTorch GCNAggregator."""
    # TODO(synk): gat=True attention branch (W, a, leakyrelu) is not built by the
    # default torch constructor and is not implemented here.

    def __init__(self, feature_table):
        N, D = feature_table.shape
        self._D = D
        self._Dp, self._tn = _pad_and_tile(D, 128, _TN)
        # Pad the feature dim once at init so every per-forward gather lands pre-padded
        # (avoids a zeros+scatter pass per call).
        self.feature_table = jnp.pad(feature_table, ((0, 0), (0, self._Dp - D)))

    def forward(self, nodes, to_neighs):
        mask, inv_row, inv_col, idx, (B, U, tm, tk) = build_host_inputs(nodes, to_neighs)
        # features(LongTensor(unique_nodes_list)) -> gather (JAX glue)
        emb = jnp.take(self.feature_table, jnp.asarray(idx), axis=0)   # (Up, Dp) f32
        out_p = gcn_aggregate(
            jnp.asarray(mask), emb, jnp.asarray(inv_col), jnp.asarray(inv_row),
            tm, self._tn, tk)
        return out_p[:B, :self._D]


# --------------------------------- main --------------------------------------
if __name__ == "__main__":
    NUM_NODES = 24   # total graph nodes (embedding table rows)
    FEAT_DIM = 32    # feature dimension
    BATCH = 8        # nodes in the batch

    key = jax.random.PRNGKey(0)
    feature_table = jax.random.normal(key, (NUM_NODES, FEAT_DIM), dtype=jnp.float32)

    # deterministic synthetic graph
    random.seed(0)
    nodes = list(range(BATCH))
    to_neighs = [
        set(random.sample(range(NUM_NODES), k=random.randint(2, 5)))
        for _ in range(BATCH)
    ]

    agg = GCNAggregatorPallas(feature_table)
    to_feats = jax.block_until_ready(agg.forward(nodes, to_neighs))

    # reference: exactly the torch math, in numpy f32
    samp_neighs = [set(n) | {int(nodes[i])} for i, n in enumerate(to_neighs)]
    unique_nodes_list = list(set.union(*samp_neighs))
    unique_nodes = {n: i for i, n in enumerate(unique_nodes_list)}
    mask_ref = np.zeros((BATCH, len(unique_nodes_list)), np.float32)
    cols = [unique_nodes[n] for s in samp_neighs for n in s]
    rows = [i for i, s in enumerate(samp_neighs) for _ in s]
    mask_ref[rows, cols] = 1.0
    mask_ref = (mask_ref
                / np.sqrt(mask_ref.sum(1, keepdims=True))
                / np.sqrt(mask_ref.sum(0, keepdims=True)))
    emb_ref = np.asarray(feature_table)[np.asarray(unique_nodes_list)]
    ref = mask_ref @ emb_ref

    np.testing.assert_allclose(np.asarray(to_feats), ref, rtol=1e-4, atol=1e-5)
    assert to_feats.shape == (BATCH, FEAT_DIM)
    print("KERNEL_OK")
</pallas_src>

<mosaic_0001>
module attributes {stable_mosaic.version = 11 : i64} {
  func.func @gcn_agg_kernel(%arg0: i32, %arg1: i32, %arg2: i32, %arg3: memref<16x128xbf16, #tpu.memory_space<vmem>>, %arg4: memref<128x128xf32, #tpu.memory_space<vmem>>, %arg5: memref<128x1xf32, #tpu.memory_space<vmem>>, %arg6: memref<16x1xf32, #tpu.memory_space<vmem>>, %arg7: memref<16x128xf32, #tpu.memory_space<vmem>>, %arg8: memref<16x128xf32, #tpu.memory_space<vmem>>) attributes {dimension_semantics = [#tpu.dimension_semantics<parallel>, #tpu.dimension_semantics<parallel>, #tpu.dimension_semantics<arbitrary>], iteration_bounds = array<i64: 1, 1, 1>, scalar_prefetch = 0 : i64, scratch_operands = 1 : i64, tpu.core_type = #tpu.core_type<tc>, window_params = [{transform_indices = @transform_0, window_bounds = array<i64: 16, 128>}, {transform_indices = @transform_1, window_bounds = array<i64: 128, 128>}, {transform_indices = @transform_2, window_bounds = array<i64: 128, 1>}, {transform_indices = @transform_3, window_bounds = array<i64: 16, 1>}, {transform_indices = @transform_4, window_bounds = array<i64: 16, 128>}]} {
    %c0_i32 = arith.constant 0 : i32
    %0 = arith.cmpi eq, %arg2, %c0_i32 : i32
    %1 = arith.extui %0 : i1 to i32
    %c0_i32_0 = arith.constant 0 : i32
    %2 = arith.cmpi ne, %1, %c0_i32_0 : i32
    scf.if %2 {
      %cst_12 = arith.constant 0.000000e+00 : f32
      %16 = vector.broadcast %cst_12 : f32 to vector<16x128xf32>
      %c0_13 = arith.constant 0 : index
      %c0_14 = arith.constant 0 : index
      %17 = vector.load %arg8[%c0_13, %c0_14] : memref<16x128xf32, #tpu.memory_space<vmem>>, vector<16x128xf32>
      tpu.vector_store %arg8[%c0_13, %c0_14], %16 {strides = array<i32>} : memref<16x128xf32, #tpu.memory_space<vmem>>, vector<16x128xf32>,
    } else {
    }
    %c0 = arith.constant 0 : index
    %c0_1 = arith.constant 0 : index
    %3 = vector.load %arg4[%c0, %c0_1] : memref<128x128xf32, #tpu.memory_space<vmem>>, vector<128x128xf32>
    %c0_2 = arith.constant 0 : index
    %c0_3 = arith.constant 0 : index
    %4 = vector.load %arg5[%c0_2, %c0_3] : memref<128x1xf32, #tpu.memory_space<vmem>>, vector<128x1xf32>
    %5 = vector.broadcast %4 : vector<128x1xf32> to vector<128x128xf32>
    %6 = arith.mulf %3, %5 : vector<128x128xf32>
    %c0_4 = arith.constant 0 : index
    %c0_5 = arith.constant 0 : index
    %7 = vector.load %arg8[%c0_4, %c0_5] : memref<16x128xf32, #tpu.memory_space<vmem>>, vector<16x128xf32>
    %c0_6 = arith.constant 0 : index
    %c0_7 = arith.constant 0 : index
    %8 = vector.load %arg3[%c0_6, %c0_7] : memref<16x128xbf16, #tpu.memory_space<vmem>>, vector<16x128xbf16>
    %9 = arith.extf %8 : vector<16x128xbf16> to vector<16x128xf32>
    %cst = arith.constant dense<0.000000e+00> : vector<16x128xf32>
    %10 = tpu.matmul %9, %6, %cst {dimension_numbers = #tpu.dot_dimension_numbers<[1], [0], [0], [1], [0, 0, 1, 1], [], []>} : vector<16x128xf32>, vector<128x128xf32>, vector<16x128xf32> -> vector<16x128xf32>
    %11 = arith.addf %7, %10 : vector<16x128xf32>
    %c0_8 = arith.constant 0 : index
    %c0_9 = arith.constant 0 : index
    %12 = vector.load %arg8[%c0_8, %c0_9] : memref<16x128xf32, #tpu.memory_space<vmem>>, vector<16x128xf32>
    tpu.vector_store %arg8[%c0_8, %c0_9], %11 {strides = array<i32>} : memref<16x128xf32, #tpu.memory_space<vmem>>, vector<16x128xf32>,
    %c0_i32_10 = arith.constant 0 : i32
    %13 = arith.cmpi eq, %arg2, %c0_i32_10 : i32
    %14 = arith.extui %13 : i1 to i32
    %c0_i32_11 = arith.constant 0 : i32
    %15 = arith.cmpi ne, %14, %c0_i32_11 : i32
    scf.if %15 {
      %c0_12 = arith.constant 0 : index
      %c0_13 = arith.constant 0 : index
      %16 = vector.load %arg8[%c0_12, %c0_13] : memref<16x128xf32, #tpu.memory_space<vmem>>, vector<16x128xf32>
      %c0_14 = arith.constant 0 : index
      %c0_15 = arith.constant 0 : index
      %17 = vector.load %arg6[%c0_14, %c0_15] : memref<16x1xf32, #tpu.memory_space<vmem>>, vector<16x1xf32>
      %18 = vector.broadcast %17 : vector<16x1xf32> to vector<16x128xf32>
      %19 = arith.mulf %16, %18 : vector<16x128xf32>
      %c0_16 = arith.constant 0 : index
      %c0_17 = arith.constant 0 : index
      %20 = vector.load %arg7[%c0_16, %c0_17] : memref<16x128xf32, #tpu.memory_space<vmem>>, vector<16x128xf32>
      tpu.vector_store %arg7[%c0_16, %c0_17], %19 {strides = array<i32>} : memref<16x128xf32, #tpu.memory_space<vmem>>, vector<16x128xf32>,
    } else {
    }
    return
  }
  func.func @transform_0(%arg0: i32, %arg1: i32, %arg2: i32) -> (i32, i32) {
    %c0_i32 = arith.constant 0 : i32
    return %arg0, %arg2 : i32, i32
  }
  func.func @transform_1(%arg0: i32, %arg1: i32, %arg2: i32) -> (i32, i32) {
    %c0_i32 = arith.constant 0 : i32
    return %arg2, %arg1 : i32, i32
  }
  func.func @transform_2(%arg0: i32, %arg1: i32, %arg2: i32) -> (i32, i32) {
    %c0_i32 = arith.constant 0 : i32
    %c0_i32_0 = arith.constant 0 : i32
    return %arg2, %c0_i32 : i32, i32
  }
  func.func @transform_3(%arg0: i32, %arg1: i32, %arg2: i32) -> (i32, i32) {
    %c0_i32 = arith.constant 0 : i32
    %c0_i32_0 = arith.constant 0 : i32
    return %arg0, %c0_i32 : i32, i32
  }
  func.func @transform_4(%arg0: i32, %arg1: i32, %arg2: i32) -> (i32, i32) {
    %c0_i32 = arith.constant 0 : i32
    return %arg0, %arg1 : i32, i32
  }
}

</mosaic_0001>

<llo_original>
// kernel: tpu_custom_call.1
$region0: #{tpu_custom_call.1}
  #allocation0 [shape = 'u32[]', space=smem, size = 0x4, offset = 0x4, fixed_abs, tag = 'smem constant byte address 0x4 - core index']
  #allocation1 [shape = 'u32[72,128]{1,0:T(1,128)}', space=vmem, size = 0x9000, scoped, tag = 'internal scratch']
  #allocation2 [shape = 'f32[16,128]{1,0:T(8,128)}', space=vmem, size = 0x2000, scoped, tag = 'scratch operand']
  %s0 = inlined_call_operand.vmem [shape: bf16[16,128], index: 0, kind: input, shape index: {}]
  %s1 = inlined_call_operand.vmem [shape: f32[128,128], index: 1, kind: input, shape index: {}]
  %s2 = inlined_call_operand.vmem [shape: f32[128,1], index: 2, kind: input, shape index: {}]
  %s3 = inlined_call_operand.vmem [shape: f32[16,1], index: 3, kind: input, shape index: {}]
  %s4 = inlined_call_operand.hbm [shape: f32[16,128], index: 4, kind: output, shape index: {}]
  %s5 = sld [smem:[#allocation0]]
  $region34: #{tpu_custom_call.1} parent=0
    _
  %s7 = ssub.s32 1, %s5
  %s8 = scalar_select 0, %s7, %s5
  $region1: #{tpu_custom_call.1} parent=0
    #allocation3 [shape = 'u8[8192]{0}', space=vmem, size = 0x2000, scoped, tag = 'output window, operand 0, single buffered']
    #allocation4 [shape = 's32[1]{0}', space=sflag, size = 0x4, scoped, tag = 'scoped memory for tpu_custom_call.1']
    %9 = vsyncpa [#allocation4], 0
    // Predicated region
    $region2: #{tpu_custom_call.1} parent=1 // pred_check
      _
    $region3: #{tpu_custom_call.1} parent=1 // pred_check_branch
      %11 = sbr.rel (0) target = $region5
    $region4: #{tpu_custom_call.1} parent=1 // pred_region
      _
    $region5: #{tpu_custom_call.1} parent=1 // pred_fallthru
      _
    // Predicated region
    $region6: #{tpu_custom_call.1} parent=1 // pred_check
      _
    $region7: #{tpu_custom_call.1} parent=1 // pred_check_branch
      %13 = sbr.rel (0) target = $region9
    $region8: #{tpu_custom_call.1} parent=1 // pred_region
      _
    $region9: #{tpu_custom_call.1} parent=1 // pred_fallthru
      _
    // Predicated region
    $region10: #{tpu_custom_call.1} parent=1 // pred_check
      _
    $region11: #{tpu_custom_call.1} parent=1 // pred_check_branch
      %15 = sbr.rel (0) target = $region13
    $region12: #{tpu_custom_call.1} parent=1 // pred_region
      _
    $region13: #{tpu_custom_call.1} parent=1 // pred_fallthru
      _
    // Predicated region
    $region14: #{tpu_custom_call.1} parent=1 // pred_check
      _
    $region15: #{tpu_custom_call.1} parent=1 // pred_check_branch
      %17 = sbr.rel (0) target = $region17
    $region16: #{tpu_custom_call.1} parent=1 // pred_region
      _
    $region17: #{tpu_custom_call.1} parent=1 // pred_fallthru
      _
    %p18 = scmp.eq.s32.totalorder 0, 0
    // Predicated region
    $region18: #{tpu_custom_call.1} parent=1 // pred_check
      %p19 = pneg %p18
    $region19: #{tpu_custom_call.1} parent=1 // pred_check_branch
      %21 = sbr.rel (%p19) target = $region21
    $region20: #{tpu_custom_call.1} parent=1 // pred_region
      %22 = vst [vmem:[#allocation2] sm:$0xff] 0.0
      %23 = vst [vmem:[#allocation2 + $0x8] sm:$0xff] 0.0
    $region21: #{tpu_custom_call.1} parent=1 // pred_fallthru
      _
    %v24 = vld [vmem:[%s1] sm:$0xff]
    %v25 = vld [vmem:[%s1 + $0x8] sm:$0xff]
    %v26 = vld [vmem:[%s1 + $0x10] sm:$0xff]
    %v27 = vld [vmem:[%s1 + $0x18] sm:$0xff]
    %v28 = vld [vmem:[%s1 + $0x20] sm:$0xff]
    %v29 = vld [vmem:[%s1 + $0x28] sm:$0xff]
    %v30 = vld [vmem:[%s1 + $0x30] sm:$0xff]
    %v31 = vld [vmem:[%s1 + $0x38] sm:$0xff]
    %v32 = vld [vmem:[%s1 + $0x40] sm:$0xff]
    %v33 = vld [vmem:[%s1 + $0x48] sm:$0xff]
    %v34 = vld [vmem:[%s1 + $0x50] sm:$0xff]
    %v35 = vld [vmem:[%s1 + $0x58] sm:$0xff]
    %v36 = vld [vmem:[%s1 + $0x60] sm:$0xff]
    %v37 = vld [vmem:[%s1 + $0x68] sm:$0xff]
    %v38 = vld [vmem:[%s1 + $0x70] sm:$0xff]
    %v39 = vld [vmem:[%s1 + $0x78] sm:$0xff]
    %v40 = vld [vmem:[%s2] sm:$0xff]
    %v41 = vld [vmem:[%s2 + $0x8] sm:$0xff]
    %v42 = vld [vmem:[%s2 + $0x10] sm:$0xff]
    %v43 = vld [vmem:[%s2 + $0x18] sm:$0xff]
    %v44 = vld [vmem:[%s2 + $0x20] sm:$0xff]
    %v45 = vld [vmem:[%s2 + $0x28] sm:$0xff]
    %v46 = vld [vmem:[%s2 + $0x30] sm:$0xff]
    %v47 = vld [vmem:[%s2 + $0x38] sm:$0xff]
    %v48 = vld [vmem:[%s2 + $0x40] sm:$0xff]
    %v49 = vld [vmem:[%s2 + $0x48] sm:$0xff]
    %v50 = vld [vmem:[%s2 + $0x50] sm:$0xff]
    %v51 = vld [vmem:[%s2 + $0x58] sm:$0xff]
    %v52 = vld [vmem:[%s2 + $0x60] sm:$0xff]
    %v53 = vld [vmem:[%s2 + $0x68] sm:$0xff]
    %v54 = vld [vmem:[%s2 + $0x70] sm:$0xff]
    %v55 = vld [vmem:[%s2 + $0x78] sm:$0xff]
    %57 = vset.pattern.permute.xlu0 0
    %58 = vperm.xlu0 %57, %v40
    %v59 = vpop.permute.xlu0 %58
    %62 = vset.pattern.permute.xlu0 0
    %63 = vperm.xlu0 %62, %v41
    %v64 = vpop.permute.xlu0 %63
    %67 = vset.pattern.permute.xlu0 0
    %68 = vperm.xlu0 %67, %v42
    %v69 = vpop.permute.xlu0 %68
    %72 = vset.pattern.permute.xlu0 0
    %73 = vperm.xlu0 %72, %v43
    %v74 = vpop.permute.xlu0 %73
    %77 = vset.pattern.permute.xlu0 0
    %78 = vperm.xlu0 %77, %v44
    %v79 = vpop.permute.xlu0 %78
    %82 = vset.pattern.permute.xlu0 0
    %83 = vperm.xlu0 %82, %v45
    %v84 = vpop.permute.xlu0 %83
    %87 = vset.pattern.permute.xlu0 0
    %88 = vperm.xlu0 %87, %v46
    %v89 = vpop.permute.xlu0 %88
    %92 = vset.pattern.permute.xlu0 0
    %93 = vperm.xlu0 %92, %v47
    %v94 = vpop.permute.xlu0 %93
    %97 = vset.pattern.permute.xlu0 0
    %98 = vperm.xlu0 %97, %v48
    %v99 = vpop.permute.xlu0 %98
    %102 = vset.pattern.permute.xlu0 0
    %103 = vperm.xlu0 %102, %v49
    %v104 = vpop.permute.xlu0 %103
    %107 = vset.pattern.permute.xlu0 0
    %108 = vperm.xlu0 %107, %v50
    %v109 = vpop.permute.xlu0 %108
    %112 = vset.pattern.permute.xlu0 0
    %113 = vperm.xlu0 %112, %v51
    %v114 = vpop.permute.xlu0 %113
    %117 = vset.pattern.permute.xlu0 0
    %118 = vperm.xlu0 %117, %v52
    %v119 = vpop.permute.xlu0 %118
    %122 = vset.pattern.permute.xlu0 0
    %123 = vperm.xlu0 %122, %v53
    %v124 = vpop.permute.xlu0 %123
    %127 = vset.pattern.permute.xlu0 0
    %128 = vperm.xlu0 %127, %v54
    %v129 = vpop.permute.xlu0 %128
    %132 = vset.pattern.permute.xlu0 0
    %133 = vperm.xlu0 %132, %v55
    %v134 = vpop.permute.xlu0 %133
    %v136 = vmul.f32 %v24, %v59
    %v137 = vmul.f32 %v25, %v64
    %v138 = vmul.f32 %v26, %v69
    %v139 = vmul.f32 %v27, %v74
    %v140 = vmul.f32 %v28, %v79
    %v141 = vmul.f32 %v29, %v84
    %v142 = vmul.f32 %v30, %v89
    %v143 = vmul.f32 %v31, %v94
    %v144 = vmul.f32 %v32, %v99
    %v145 = vmul.f32 %v33, %v104
    %v146 = vmul.f32 %v34, %v109
    %v147 = vmul.f32 %v35, %v114
    %v148 = vmul.f32 %v36, %v119
    %v149 = vmul.f32 %v37, %v124
    %v150 = vmul.f32 %v38, %v129
    %v151 = vmul.f32 %v39, %v134
    %v152 = vld [vmem:[#allocation2] sm:$0xff]
    %v153 = vld [vmem:[#allocation2 + $0x8] sm:$0xff]
    %v154 = vld [vmem:[%s0] sm:$0xf]
    %v155 = vld [vmem:[%s0 + $0x4] sm:$0xf]
    %v156 = vunpack.c.l.bf16 %v154
    %v157 = vunpack.c.l.bf16 %v155
    %158 = vmatpush.msra.mxu0 %v151
    %159 = vmatpush.msra.mxu0 %v150
    %160 = vmatpush.msra.mxu0 %v149
    %161 = vmatpush.msra.mxu0 %v148
    %162 = vmatpush.msra.mxu0 %v147
    %163 = vmatpush.msra.mxu0 %v146
    %164 = vmatpush.msra.mxu0 %v145
    %165 = vmatpush.msra.mxu0 %v144
    %166 = vmatpush.msra.mxu0 %v143
    %167 = vmatpush.msra.mxu0 %v142
    %168 = vmatpush.msra.mxu0 %v141
    %169 = vmatpush.msra.mxu0 %v140
    %170 = vmatpush.msra.mxu0 %v139
    %171 = vmatpush.msra.mxu0 %v138
    %172 = vmatpush.msra.mxu0 %v137
    %173 = vmatpush.msra.mxu0 %v136
    %174 = vmatmul.f32.gmra.mxu0 %v156
    %v175 = vpop.f32.mrf.mxu0
    %v176 = vadd.f32 0.0, %v175
    %177 = vmatmul.f32.gmra.mxu0 %v157
    %v178 = vpop.f32.mrf.mxu0
    %v179 = vadd.f32 0.0, %v178
    %180 = vdwg.mxu0
    %v181 = vadd.f32 %v152, %v176
    %v182 = vadd.f32 %v153, %v179
    %183 = vst [vmem:[#allocation2] sm:$0xff] %v181
    %184 = vst [vmem:[#allocation2 + $0x8] sm:$0xff] %v182
    // Predicated region
    $region22: #{tpu_custom_call.1} parent=1 // pred_check
      %p185 = pneg %p18
    $region23: #{tpu_custom_call.1} parent=1 // pred_check_branch
      %187 = sbr.rel (%p185) target = $region25
    $region24: #{tpu_custom_call.1} parent=1 // pred_region
      %v188 = vld [vmem:[#allocation2] sm:$0xff]
      %v189 = vld [vmem:[#allocation2 + $0x8] sm:$0xff]
      %v190 = vld [vmem:[%s3] sm:$0xff]
      %v191 = vld [vmem:[%s3 + $0x8] sm:$0xff]
      %193 = vset.pattern.permute.xlu0 0
      %194 = vperm.xlu0 %193, %v190
      %v195 = vpop.permute.xlu0 %194
      %198 = vset.pattern.permute.xlu0 0
      %199 = vperm.xlu0 %198, %v191
      %v200 = vpop.permute.xlu0 %199
      %v202 = vmul.f32 %v188, %v195
      %v203 = vmul.f32 %v189, %v200
      %204 = vst [vmem:[#allocation3] sm:$0xff] %v202
      %205 = vst [vmem:[#allocation3 + $0x8] sm:$0xff] %v203
    $region25: #{tpu_custom_call.1} parent=1 // pred_fallthru
      _
    // Predicated region
    $region26: #{tpu_custom_call.1} parent=1 // pred_check
      _
    $region27: #{tpu_custom_call.1} parent=1 // pred_check_branch
      %207 = sbr.rel (0) target = $region29
    $region28: #{tpu_custom_call.1} parent=1 // pred_region
      %209 = vsyncadd [#allocation4], 0
      %s210 = sshll.u32 [#allocation3], 4
      %s211 = int_to_ptr.vmem [resolvable:$true] %s210
      %s212 = sshll.u32 %s4, 4
      %s213 = int_to_ptr.hbm [resolvable:$true] %s212
      %218 = dma.vmem_to_hbm [thread:$0]  %s211, 256, %s213, [#allocation4], 128, 128, 8
    $region29: #{tpu_custom_call.1} parent=1 // pred_fallthru
      _
    // Predicated region
    $region30: #{tpu_custom_call.1} parent=1 // pred_check
      _
    $region31: #{tpu_custom_call.1} parent=1 // pred_check_branch
      %220 = sbr.rel (0) target = $region33
    $region32: #{tpu_custom_call.1} parent=1 // pred_region
      %222 = dma.done [#allocation4], 256
    $region33: #{tpu_custom_call.1} parent=1 // pred_fallthru
      _
    %223 = vsyncpa [#allocation4], 1

</llo_original>
